<compile_context>
chip_gen: v5e
topology: v5e:2x2
jax: 0.10.0
libtpu: 0.0.40
codegen_flags: <defaults>
</compile_context>

<pallas_src>
import functools

import numpy as np
import jax
import jax.numpy as jnp
from jax.experimental import pallas as pl
from jax.experimental.pallas import tpu as pltpu


def _round_up(x, m):
    return ((x + m - 1) // m) * m


def _index_put_acc_kernel(idx_ref, inp_ref, val_ref, out_ref, acc_ref, *, n_idx):
    """Grid step (r, k): rows [r*tn, (r+1)*tn), scatter entries [k*tk, (k+1)*tk)."""
    r = pl.program_id(0)
    k = pl.program_id(1)
    tn = out_ref.shape[0]
    tk = idx_ref.shape[1]

    @pl.when(k == 0)
    def _():
        acc_ref[...] = inp_ref[...]

    row_start = r * tn
    col_start = k * tk

    # (tn, tk) row / column ids for this tile (>=2-D iota required on TPU).
    row_ids = jax.lax.broadcasted_iota(jnp.int32, (tn, tk), 0) + row_start
    col_ids = jax.lax.broadcasted_iota(jnp.int32, (tn, tk), 1) + col_start

    # One-hot scatter matrix; columns beyond M (partial k block padding) are
    # masked so undefined index values can never hit a row.
    hit = (idx_ref[...] == row_ids) & (col_ids < n_idx)          # (tn, tk) bool
    onehot = hit.astype(jnp.float32)

    # Mask the value tile as well: 0 * NaN-garbage would poison the matmul.
    kvalid = (jax.lax.broadcasted_iota(jnp.int32, (tk, 1), 0) + col_start) < n_idx
    val = jnp.where(kvalid, val_ref[...], 0.0)                   # (tk, C)

    acc_ref[...] += jnp.dot(onehot, val, preferred_element_type=jnp.float32)

    @pl.when(k == pl.num_programs(1) - 1)
    def _():
        out_ref[...] = acc_ref[...].astype(out_ref.dtype)


def index_put_accumulate_2d(inp, index, value):
    """aten.index_put(input, [index], value, accumulate=True) for 2-D float input."""
    N, C = inp.shape
    (M,) = index.shape
    assert value.shape == (M, C)

    inp = inp.astype(jnp.float32)
    value = value.astype(jnp.float32)

    # PyTorch allows negative indices (wrap by +N); int32 is safe while N < 2**31.
    idx = index.astype(jnp.int32)
    idx = jnp.where(idx < 0, idx + N, idx)
    idx2 = idx.reshape(1, M)

    # Row tiling: always tiled (never a tn=N fallback); >=2 row blocks whenever
    # possible so the "parallel" axis can be split across v7x's two TensorCores.
    tn = max(8, min(512, _round_up(pl.cdiv(N, 2), 8)))
    grid_rows = pl.cdiv(N, tn)

    # Scatter-length tiling: the MXU contraction dim stays a dense multiple of
    # 128 and value / one-hot VMEM stays O(tk*C) regardless of M.
    tk = min(512, _round_up(M, 128))
    grid_k = pl.cdiv(M, tk)

    kernel = functools.partial(_index_put_acc_kernel, n_idx=M)

    return pl.pallas_call(
        kernel,
        out_shape=jax.ShapeDtypeStruct((N, C), jnp.float32),
        grid_spec=pltpu.PrefetchScalarGridSpec(
            num_scalar_prefetch=0,
            grid=(grid_rows, grid_k),
            in_specs=[
                pl.BlockSpec((1, tk), lambda r, k: (0, k)),    # index k-tile
                pl.BlockSpec((tn, C), lambda r, k: (r, 0)),    # input row block
                pl.BlockSpec((tk, C), lambda r, k: (k, 0)),    # value k-tile
            ],
            out_specs=pl.BlockSpec((tn, C), lambda r, k: (r, 0)),
            scratch_shapes=[pltpu.VMEM((tn, C), jnp.float32)],
        ),
        compiler_params=pltpu.CompilerParams(
            dimension_semantics=("parallel", "arbitrary"),
            vmem_limit_bytes=48 << 20),
        # Every output row is rewritten, so aliasing the input is safe and avoids
        # a second N*C HBM buffer when the caller donates `input`.
        input_output_aliases={1: 0},
    )(idx2, inp, value)


def _ref_index_put_accumulate(inp, index, value):
    out = np.array(inp, dtype=np.float64).copy()
    np.add.at(out, np.asarray(index), np.asarray(value, dtype=np.float64))
    return out.astype(np.float32)


if __name__ == "__main__":
    ok = True

    # Shapes follow the torch-mlir e2e test: input (10, 8) float32, index (5,)
    # with values in [0, 4) (duplicates exercise accumulate), value (5, 8) f32.
    k1, k2, k3 = jax.random.split(jax.random.PRNGKey(0), 3)
    N, C, M = 10, 8, 5
    inp = jax.random.normal(k1, (N, C), dtype=jnp.float32)
    index = jax.random.randint(k2, (M,), minval=0, maxval=4, dtype=jnp.int32)
    value = jax.random.normal(k3, (M, C), dtype=jnp.float32)

    out = jax.block_until_ready(index_put_accumulate_2d(inp, index, value))
    ref = _ref_index_put_accumulate(np.asarray(inp), np.asarray(index),
                                    np.asarray(value))
    ok &= bool(np.allclose(np.asarray(out), ref, rtol=1e-5, atol=1e-5))

    # Second, ragged shape: exercises partial row / k blocks, multi-step grid,
    # duplicate and negative indices.
    k4, k5, k6 = jax.random.split(jax.random.PRNGKey(1), 3)
    N2, C2, M2 = 300, 40, 700
    inp2 = jax.random.normal(k4, (N2, C2), dtype=jnp.float32)
    index2 = jax.random.randint(k5, (M2,), minval=-N2, maxval=N2, dtype=jnp.int32)
    value2 = jax.random.normal(k6, (M2, C2), dtype=jnp.float32)

    out2 = jax.block_until_ready(index_put_accumulate_2d(inp2, index2, value2))
    ref2 = _ref_index_put_accumulate(np.asarray(inp2), np.asarray(index2),
                                     np.asarray(value2))
    ok &= bool(np.allclose(np.asarray(out2), ref2, rtol=1e-4, atol=1e-4))

    if ok:
        print("KERNEL_OK")
    else:
        print("MISMATCH")
</pallas_src>

<mosaic_0001>
module attributes {stable_mosaic.version = 11 : i64} {
  func.func @_index_put_acc_kernel(%arg0: i32, %arg1: i32, %arg2: memref<1x128xi32, #tpu.memory_space<vmem>>, %arg3: memref<8x8xf32, #tpu.memory_space<vmem>>, %arg4: memref<128x8xf32, #tpu.memory_space<vmem>>, %arg5: memref<8x8xf32, #tpu.memory_space<vmem>>, %arg6: memref<8x8xf32, #tpu.memory_space<vmem>>) attributes {dimension_semantics = [#tpu.dimension_semantics<parallel>, #tpu.dimension_semantics<arbitrary>], iteration_bounds = array<i64: 2, 1>, scalar_prefetch = 0 : i64, scratch_operands = 1 : i64, tpu.core_type = #tpu.core_type<tc>, window_params = [{transform_indices = @transform_0, window_bounds = array<i64: 1, 128>}, {transform_indices = @transform_1, window_bounds = array<i64: 8, 8>}, {transform_indices = @transform_2, window_bounds = array<i64: 128, 8>}, {transform_indices = @transform_3, window_bounds = array<i64: 8, 8>}]} {
    %c0_i32 = arith.constant 0 : i32
    %0 = arith.cmpi eq, %arg1, %c0_i32 : i32
    %1 = arith.extui %0 : i1 to i32
    %c0_i32_0 = arith.constant 0 : i32
    %2 = arith.cmpi ne, %1, %c0_i32_0 : i32
    scf.if %2 {
      %c0_12 = arith.constant 0 : index
      %c0_13 = arith.constant 0 : index
      %36 = vector.load %arg3[%c0_12, %c0_13] : memref<8x8xf32, #tpu.memory_space<vmem>>, vector<8x8xf32>
      %c0_14 = arith.constant 0 : index
      %c0_15 = arith.constant 0 : index
      %37 = vector.load %arg6[%c0_14, %c0_15] : memref<8x8xf32, #tpu.memory_space<vmem>>, vector<8x8xf32>
      tpu.vector_store %arg6[%c0_14, %c0_15], %36 {strides = array<i32>} : memref<8x8xf32, #tpu.memory_space<vmem>>, vector<8x8xf32>,
    } else {
    }
    %c8_i32 = arith.constant 8 : i32
    %3 = arith.muli %arg0, %c8_i32 : i32
    %c128_i32 = arith.constant 128 : i32
    %4 = arith.muli %arg1, %c128_i32 : i32
    %5 = tpu.iota {dimensions = array<i32: 0>} : vector<8x128xi32>
    %6 = vector.broadcast %3 : i32 to vector<8x128xi32>
    %7 = arith.addi %5, %6 : vector<8x128xi32>
    %8 = tpu.iota {dimensions = array<i32: 1>} : vector<8x128xi32>
    %9 = vector.broadcast %4 : i32 to vector<8x128xi32>
    %10 = arith.addi %8, %9 : vector<8x128xi32>
    %c0 = arith.constant 0 : index
    %c0_1 = arith.constant 0 : index
    %11 = vector.load %arg2[%c0, %c0_1] : memref<1x128xi32, #tpu.memory_space<vmem>>, vector<1x128xi32>
    %12 = vector.broadcast %11 : vector<1x128xi32> to vector<8x128xi32>
    %13 = arith.cmpi eq, %12, %7 : vector<8x128xi32>
    %c5_i32 = arith.constant 5 : i32
    %14 = vector.broadcast %c5_i32 : i32 to vector<8x128xi32>
    %15 = arith.cmpi slt, %10, %14 : vector<8x128xi32>
    %16 = arith.andi %13, %15 : vector<8x128xi1>
    %17 = arith.extui %16 : vector<8x128xi1> to vector<8x128xi32>
    %18 = arith.sitofp %17 : vector<8x128xi32> to vector<8x128xf32>
    %19 = tpu.iota {dimensions = array<i32: 0>} : vector<128x1xi32>
    %20 = vector.broadcast %4 : i32 to vector<128x1xi32>
    %21 = arith.addi %19, %20 : vector<128x1xi32>
    %c5_i32_2 = arith.constant 5 : i32
    %22 = vector.broadcast %c5_i32_2 : i32 to vector<128x1xi32>
    %23 = arith.cmpi slt, %21, %22 : vector<128x1xi32>
    %c0_3 = arith.constant 0 : index
    %c0_4 = arith.constant 0 : index
    %24 = vector.load %arg4[%c0_3, %c0_4] : memref<128x8xf32, #tpu.memory_space<vmem>>, vector<128x8xf32>
    %cst = arith.constant 0.000000e+00 : f32
    %25 = vector.shape_cast %23 : vector<128x1xi1> to vector<128x1xi1>
    %26 = vector.broadcast %25 : vector<128x1xi1> to vector<128x8xi1>
    %27 = vector.broadcast %cst : f32 to vector<128x8xf32>
    %28 = arith.select %26, %24, %27 : vector<128x8xi1>, vector<128x8xf32>
    %c0_5 = arith.constant 0 : index
    %c0_6 = arith.constant 0 : index
    %29 = vector.load %arg6[%c0_5, %c0_6] : memref<8x8xf32, #tpu.memory_space<vmem>>, vector<8x8xf32>
    %cst_7 = arith.constant dense<0.000000e+00> : vector<8x8xf32>
    %30 = tpu.matmul %18, %28, %cst_7 {dimension_numbers = #tpu.dot_dimension_numbers<[1], [0], [0], [1], [0, 0, 1, 1], [], []>} : vector<8x128xf32>, vector<128x8xf32>, vector<8x8xf32> -> vector<8x8xf32>
    %31 = arith.addf %29, %30 : vector<8x8xf32>
    %c0_8 = arith.constant 0 : index
    %c0_9 = arith.constant 0 : index
    %32 = vector.load %arg6[%c0_8, %c0_9] : memref<8x8xf32, #tpu.memory_space<vmem>>, vector<8x8xf32>
    tpu.vector_store %arg6[%c0_8, %c0_9], %31 {strides = array<i32>} : memref<8x8xf32, #tpu.memory_space<vmem>>, vector<8x8xf32>,
    %c0_i32_10 = arith.constant 0 : i32
    %33 = arith.cmpi eq, %arg1, %c0_i32_10 : i32
    %34 = arith.extui %33 : i1 to i32
    %c0_i32_11 = arith.constant 0 : i32
    %35 = arith.cmpi ne, %34, %c0_i32_11 : i32
    scf.if %35 {
      %c0_12 = arith.constant 0 : index
      %c0_13 = arith.constant 0 : index
      %36 = vector.load %arg6[%c0_12, %c0_13] : memref<8x8xf32, #tpu.memory_space<vmem>>, vector<8x8xf32>
      %c0_14 = arith.constant 0 : index
      %c0_15 = arith.constant 0 : index
      %37 = vector.load %arg5[%c0_14, %c0_15] : memref<8x8xf32, #tpu.memory_space<vmem>>, vector<8x8xf32>
      tpu.vector_store %arg5[%c0_14, %c0_15], %36 {strides = array<i32>} : memref<8x8xf32, #tpu.memory_space<vmem>>, vector<8x8xf32>,
    } else {
    }
    return
  }
  func.func @transform_0(%arg0: i32, %arg1: i32) -> (i32, i32) {
    %c0_i32 = arith.constant 0 : i32
    %c0_i32_0 = arith.constant 0 : i32
    return %c0_i32, %arg1 : i32, i32
  }
  func.func @transform_1(%arg0: i32, %arg1: i32) -> (i32, i32) {
    %c0_i32 = arith.constant 0 : i32
    %c0_i32_0 = arith.constant 0 : i32
    return %arg0, %c0_i32 : i32, i32
  }
  func.func @transform_2(%arg0: i32, %arg1: i32) -> (i32, i32) {
    %c0_i32 = arith.constant 0 : i32
    %c0_i32_0 = arith.constant 0 : i32
    return %arg1, %c0_i32 : i32, i32
  }
  func.func @transform_3(%arg0: i32, %arg1: i32) -> (i32, i32) {
    %c0_i32 = arith.constant 0 : i32
    %c0_i32_0 = arith.constant 0 : i32
    return %arg0, %c0_i32 : i32, i32
  }
}

</mosaic_0001>

<llo_original>
// kernel: tpu_custom_call.1
$region0: #{tpu_custom_call.1}
  #allocation0 [shape = 'u32[]', space=smem, size = 0x4, offset = 0x4, fixed_abs, tag = 'smem constant byte address 0x4 - core index']
  #allocation1 [shape = 'u32[72,128]{1,0:T(1,128)}', space=vmem, size = 0x9000, scoped, tag = 'internal scratch']
  #allocation2 [shape = 'f32[8,8]{1,0:T(8,128)}', space=vmem, size = 0x1000, scoped, tag = 'scratch operand']
  %s0 = inlined_call_operand.vmem [shape: s32[1,5], index: 0, kind: input, shape index: {}]
  %s1 = inlined_call_operand.vmem [shape: f32[10,8], index: 1, kind: input, shape index: {}, may-alias: {1,3}]
  %s2 = inlined_call_operand.vmem [shape: f32[5,8], index: 2, kind: input, shape index: {}]
  %s3 = inlined_call_operand.vmem [shape: f32[10,8], index: 3, kind: output, shape index: {}, may-alias: {1,3}]
  %s4 = sld [smem:[#allocation0]]
  $region53: #{tpu_custom_call.1} parent=0
    _
  %s6 = ssub.s32 1, %s4
  %s7 = scalar_select 0, %s6, %s4
  loop: start=0, step=1, limit=4
  $region2: #{tpu_custom_call.1} parent=0 // loop_pre_header
    _
  $region3: #{tpu_custom_call.1} parent=0 // loop_header
    %s9 = sphi 0, %s13
    %p10 = scmp.ge.s32.totalorder %s9, 4
    %s16 = sphi 0, %s28
    %s17 = sphi 0, %s24
    %s18 = sphi 0, %s16
    %s19 = sphi 0, %s17
    %s20 = sphi 0, %s18
    %s21 = sphi 0, %s19
    %s31 = sphi 0, %s33
    %s34 = sphi 0, %s31
    %s35 = sphi 0, %s34
    %s51 = sphi 0, %s35
    %s57 = sphi 0, %s59
    %s60 = sphi 0, %s57
    %s61 = sphi 0, %s60
    %s77 = sphi 0, %s61
    %s83 = sphi 0, %s85
    %s86 = sphi 0, %s83
    %s87 = sphi 0, %s86
    %s103 = sphi 0, %s87
    %s109 = sphi 0, %s111
    %s112 = sphi 0, %s109
    %s113 = sphi 0, %s112
    %s129 = sphi 0, %s113
  $region4: #{tpu_custom_call.1} parent=0 // loop_header_branch
    %12 = sbr.rel (%p10) target = $region8
  $region5: #{tpu_custom_call.1} parent=0 // loop_body
    %s14 = ssub.s32 %s9, 1
    %s15 = ssub.s32 %s9, 2
    %s22 = sadd.s32 1, %s17
    %p23 = scmp.ge.s32.totalorder %s22, 1
    %s24 = scalar_select %p23, 0, %s22
    %s25 = sadd.s32 1, %s16
    %s26 = scalar_select %p23, %s25, %s16
    %p27 = scmp.ge.s32.totalorder %s26, 2
    %s28 = scalar_select %p27, 0, %s26
    %s29 = ssub.s32 %s17, %s24
    %p30 = scmp.eq.s32.totalorder %s29, 0
    %s32 = sadd.s32 %s31, 1
    %s33 = scalar_select %p30, %s31, %s32
    %p36 = pneg %p30
    %p37 = scmp.eq.s32.totalorder %s9, 1
    %p38 = por %p36, %p37
    %p39 = scmp.ne.s32.totalorder %s31, %s34
    %p40 = scmp.eq.s32.totalorder %s9, 0
    %p41 = por %p39, %p40
    %p42 = scmp.ne.s32.totalorder %s31, %s34
    %p43 = scmp.eq.s32.totalorder %s14, 1
    %p44 = por %p42, %p43
    %p45 = scmp.ne.s32.totalorder %s34, %s35
    %p46 = scmp.eq.s32.totalorder %s14, 0
    %p47 = por %p45, %p46
    %p48 = scmp.ne.s32.totalorder %s34, %s35
    %p49 = scmp.eq.s32.totalorder %s15, 1
    %p50 = por %p48, %p49
    %p52 = scmp.ne.s32.totalorder %s35, %s51
    %p53 = scmp.eq.s32.totalorder %s15, 0
    %p54 = por %p52, %p53
    %s55 = ssub.s32 %s16, %s28
    %p56 = scmp.eq.s32.totalorder %s55, 0
    %s58 = sadd.s32 %s57, 1
    %s59 = scalar_select %p56, %s57, %s58
    %p62 = pneg %p56
    %p63 = scmp.eq.s32.totalorder %s9, 1
    %p64 = por %p62, %p63
    %p65 = scmp.ne.s32.totalorder %s57, %s60
    %p66 = scmp.eq.s32.totalorder %s9, 0
    %p67 = por %p65, %p66
    %p68 = scmp.ne.s32.totalorder %s57, %s60
    %p69 = scmp.eq.s32.totalorder %s14, 1
    %p70 = por %p68, %p69
    %p71 = scmp.ne.s32.totalorder %s60, %s61
    %p72 = scmp.eq.s32.totalorder %s14, 0
    %p73 = por %p71, %p72
    %p74 = scmp.ne.s32.totalorder %s60, %s61
    %p75 = scmp.eq.s32.totalorder %s15, 1
    %p76 = por %p74, %p75
    %p78 = scmp.ne.s32.totalorder %s61, %s77
    %p79 = scmp.eq.s32.totalorder %s15, 0
    %p80 = por %p78, %p79
    %s81 = ssub.s32 %s17, %s24
    %p82 = scmp.eq.s32.totalorder %s81, 0
    %s84 = sadd.s32 %s83, 1
    %s85 = scalar_select %p82, %s83, %s84
    %p88 = pneg %p82
    %p89 = scmp.eq.s32.totalorder %s9, 1
    %p90 = por %p88, %p89
    %p91 = scmp.ne.s32.totalorder %s83, %s86
    %p92 = scmp.eq.s32.totalorder %s9, 0
    %p93 = por %p91, %p92
    %p94 = scmp.ne.s32.totalorder %s83, %s86
    %p95 = scmp.eq.s32.totalorder %s14, 1
    %p96 = por %p94, %p95
    %p97 = scmp.ne.s32.totalorder %s86, %s87
    %p98 = scmp.eq.s32.totalorder %s14, 0
    %p99 = por %p97, %p98
    %p100 = scmp.ne.s32.totalorder %s86, %s87
    %p101 = scmp.eq.s32.totalorder %s15, 1
    %p102 = por %p100, %p101
    %p104 = scmp.ne.s32.totalorder %s87, %s103
    %p105 = scmp.eq.s32.totalorder %s15, 0
    %p106 = por %p104, %p105
    %s107 = ssub.s32 %s16, %s28
    %p108 = scmp.eq.s32.totalorder %s107, 0
    %s110 = sadd.s32 %s109, 1
    %s111 = scalar_select %p108, %s109, %s110
    %p114 = pneg %p108
    %p115 = scmp.eq.s32.totalorder %s9, 1
    %p116 = por %p114, %p115
    %p117 = scmp.ne.s32.totalorder %s109, %s112
    %p118 = scmp.eq.s32.totalorder %s9, 0
    %p119 = por %p117, %p118
    %p120 = scmp.ne.s32.totalorder %s109, %s112
    %p121 = scmp.eq.s32.totalorder %s14, 1
    %p122 = por %p120, %p121
    %p123 = scmp.ne.s32.totalorder %s112, %s113
    %p124 = scmp.eq.s32.totalorder %s14, 0
    %p125 = por %p123, %p124
    %p126 = scmp.ne.s32.totalorder %s112, %s113
    %p127 = scmp.eq.s32.totalorder %s15, 1
    %p128 = por %p126, %p127
    %p130 = scmp.ne.s32.totalorder %s113, %s129
    %p131 = scmp.eq.s32.totalorder %s15, 0
    %p132 = por %p130, %p131
    %p133 = scmp.le.s32.totalorder 1, %s9
    %p134 = scmp.lt.s32.totalorder %s9, 3
    %p135 = pnand %p133, %p134
    %p136 = pneg %p135
    // Predicated region
    $region9: #{tpu_custom_call.1} parent=5 // pred_check
      _
    $region10: #{tpu_custom_call.1} parent=5 // pred_check_branch
      %138 = sbr.rel (%p135) target = $region12
    $region11: #{tpu_custom_call.1} parent=5 // pred_region
      %s139 = ssub.s32 %s9, 1
      // Predicated region
      $region13: #{tpu_custom_call.1} parent=11 // pred_check
        %p140 = pneg %p47
      $region14: #{tpu_custom_call.1} parent=11 // pred_check_branch
        %142 = sbr.rel (%p140) target = $region16
      $region15: #{tpu_custom_call.1} parent=11 // pred_region
        %p143 = scmp.lt.s32.totalorder %s19, 0
        %s144 = scalar_select %p143, %s19, 0
        %s145 = scalar_lea.vmem %s0, %s144
      $region16: #{tpu_custom_call.1} parent=11 // pred_fallthru
        _
      // Predicated region
      $region17: #{tpu_custom_call.1} parent=11 // pred_check
        %p146 = pneg %p99
      $region18: #{tpu_custom_call.1} parent=11 // pred_check_branch
        %148 = sbr.rel (%p146) target = $region20
      $region19: #{tpu_custom_call.1} parent=11 // pred_region
        %s149 = smul.u32 16, %s19
        %s150 = ssub.s32 1, %s149
        %s151 = smul.u32 8, %s150
        %p152 = scmp.lt.s32.totalorder %s149, 0
        %s153 = scalar_select %p152, %s149, 0
        %s154 = smul.addr %s153, 8
        %s155 = scalar_lea.vmem %s2, %s154
        %s156 = smul.u32 16, %s19
        %s157 = ssub.s32 1, %s156
        %s158 = smul.u32 8, %s157
      $region20: #{tpu_custom_call.1} parent=11 // pred_fallthru
        _
    $region12: #{tpu_custom_call.1} parent=5 // pred_fallthru
      _
    %p159 = scmp.lt.s32.totalorder %s9, 2
    // Predicated region
    $region21: #{tpu_custom_call.1} parent=5 // pred_check
      %p160 = pneg %p159
    $region22: #{tpu_custom_call.1} parent=5 // pred_check_branch
      %162 = sbr.rel (%p160) target = $region24
    $region23: #{tpu_custom_call.1} parent=5 // pred_region
      // Predicated region
      $region25: #{tpu_custom_call.1} parent=23 // pred_check
        %p163 = pneg %p67
      $region26: #{tpu_custom_call.1} parent=23 // pred_check_branch
        %165 = sbr.rel (%p163) target = $region28
      $region27: #{tpu_custom_call.1} parent=23 // pred_region
        %p166 = scmp.lt.s32.totalorder %s16, 1
        %s167 = scalar_select %p166, %s16, 1
        %s168 = smul.addr %s167, 8
        %s169 = scalar_lea.vmem %s1, %s168
      $region28: #{tpu_custom_call.1} parent=23 // pred_fallthru
        _
    $region24: #{tpu_custom_call.1} parent=5 // pred_fallthru
      _
    %p170 = scmp.le.s32.totalorder 1, %s9
    %p171 = scmp.lt.s32.totalorder %s9, 3
    %p172 = pnand %p170, %p171
    %p173 = pneg %p172
    // Predicated region
    $region29: #{tpu_custom_call.1} parent=5 // pred_check
      _
    $region30: #{tpu_custom_call.1} parent=5 // pred_check_branch
      %175 = sbr.rel (%p172) target = $region32
    $region31: #{tpu_custom_call.1} parent=5 // pred_region
      %s176 = ssub.s32 %s9, 1
      %p177 = scmp.lt.s32.totalorder %s19, 0
      %s178 = scalar_select %p177, %s19, 0
      %s179 = scalar_lea.vmem %s0, %s178
      %p180 = pneg %p47
      %p181 = pneg %p44
      %p182 = scmp.lt.s32.totalorder %s18, 1
      %s183 = scalar_select %p182, %s18, 1
      %s184 = smul.addr %s183, 8
      %s185 = scalar_lea.vmem %s1, %s184
      %p186 = pneg %p73
      %p187 = pneg %p70
      %s188 = smul.u32 16, %s19
      %s189 = ssub.s32 1, %s188
      %s190 = smul.u32 8, %s189
      %p191 = scmp.lt.s32.totalorder %s188, 0
      %s192 = scalar_select %p191, %s188, 0
      %s193 = smul.addr %s192, 8
      %s194 = scalar_lea.vmem %s2, %s193
      %p195 = pneg %p99
      %p196 = pneg %p96
      %p197 = pneg %p125
      %p198 = pneg %p122
      %p199 = scmp.lt.s32.totalorder %s18, 1
      %s200 = scalar_select %p199, %s18, 1
      %s201 = smul.addr %s200, 8
      %s202 = scalar_lea.vmem %s3, %s201
      %p203 = scmp.lt.s32.totalorder %s19, 0
      %s204 = scalar_select %p203, %s19, 0
      %s205 = scalar_lea.vmem %s0, %s204
      %p206 = scmp.lt.s32.totalorder %s18, 1
      %s207 = scalar_select %p206, %s18, 1
      %s208 = smul.addr %s207, 8
      %s209 = scalar_lea.vmem %s1, %s208
      %s210 = smul.u32 16, %s19
      %s211 = ssub.s32 1, %s210
      %s212 = smul.u32 8, %s211
      %p213 = scmp.lt.s32.totalorder %s210, 0
      %s214 = scalar_select %p213, %s210, 0
      %s215 = smul.addr %s214, 8
      %s216 = scalar_lea.vmem %s2, %s215
      %s217 = smul.u32 16, %s19
      %s218 = ssub.s32 1, %s217
      %s219 = smul.u32 8, %s218
      %p220 = scmp.lt.s32.totalorder %s18, 1
      %s221 = scalar_select %p220, %s18, 1
      %s222 = smul.addr %s221, 8
      %s223 = scalar_lea.vmem %s3, %s222
      %p224 = scmp.eq.s32.totalorder %s19, 0
      // Predicated region
      $region33: #{tpu_custom_call.1} parent=31 // pred_check
        %p225 = pneg %p224
      $region34: #{tpu_custom_call.1} parent=31 // pred_check_branch
        %227 = sbr.rel (%p225) target = $region36
      $region35: #{tpu_custom_call.1} parent=31 // pred_region
        %v228 = vld [vmem:[%s209] sm:$0xff]
        %vm229 = vcmask 64512
        %230 = vst.msk [vmem:[#allocation2] sm:$0xff] %vm229, %v228
      $region36: #{tpu_custom_call.1} parent=31 // pred_fallthru
        _
      %s231 = smul.u32 %s18, 8
      %s232 = smul.u32 %s19, 128
      %v233 = vlaneseq
      %v234 = vshrl.u32 %v233, 7
      %v235 = vstv %s231
      %v236 = vadd.s32 %v234, %v235
      %v237 = vlaneseq
      %v238 = vand.u32 %v237, 127
      %v239 = vstv %s232
      %v240 = vadd.s32 %v238, %v239
      %v241 = vld [vmem:[%s205] sm:$0x1]
      %v242 = vperm.slane %v241, 0
      %vm243 = vcmp.eq.s32.totalorder %v242, %v236
      %vm244 = vcmp.lt.s32.totalorder %v240, 5
      %vm245 = vmand %vm243, %vm244
      %v246 = vsel %vm245, 1, 0
      %v247 = vcvt.s32.f32 %v246
      %v248 = vadd.s32 %v234, 8
      %v249 = vadd.s32 %v234, 16
      %v250 = vadd.s32 %v234, 24
      %v251 = vadd.s32 %v234, 32
      %v252 = vadd.s32 %v234, 40
      %v253 = vadd.s32 %v234, 48
      %v254 = vadd.s32 %v234, 56
      %v255 = vadd.s32 %v234, 64
      %v256 = vadd.s32 %v234, 72
      %v257 = vadd.s32 %v234, 80
      %v258 = vadd.s32 %v234, 88
      %v259 = vadd.s32 %v234, 96
      %v260 = vadd.s32 %v234, 104
      %v261 = vadd.s32 %v234, 112
      %v262 = vadd.s32 %v234, 120
      %v263 = vadd.s32 %v234, %v239
      %v264 = vadd.s32 %v248, %v239
      %v265 = vadd.s32 %v249, %v239
      %v266 = vadd.s32 %v250, %v239
      %v267 = vadd.s32 %v251, %v239
      %v268 = vadd.s32 %v252, %v239
      %v269 = vadd.s32 %v253, %v239
      %v270 = vadd.s32 %v254, %v239
      %v271 = vadd.s32 %v255, %v239
      %v272 = vadd.s32 %v256, %v239
      %v273 = vadd.s32 %v257, %v239
      %v274 = vadd.s32 %v258, %v239
      %v275 = vadd.s32 %v259, %v239
      %v276 = vadd.s32 %v260, %v239
      %v277 = vadd.s32 %v261, %v239
      %v278 = vadd.s32 %v262, %v239
      %vm279 = vcmp.lt.s32.totalorder %v263, 5
      %vm280 = vcmp.lt.s32.totalorder %v264, 5
      %vm281 = vcmp.lt.s32.totalorder %v265, 5
      %vm282 = vcmp.lt.s32.totalorder %v266, 5
      %vm283 = vcmp.lt.s32.totalorder %v267, 5
      %vm284 = vcmp.lt.s32.totalorder %v268, 5
      %vm285 = vcmp.lt.s32.totalorder %v269, 5
      %vm286 = vcmp.lt.s32.totalorder %v270, 5
      %vm287 = vcmp.lt.s32.totalorder %v271, 5
      %vm288 = vcmp.lt.s32.totalorder %v272, 5
      %vm289 = vcmp.lt.s32.totalorder %v273, 5
      %vm290 = vcmp.lt.s32.totalorder %v274, 5
      %vm291 = vcmp.lt.s32.totalorder %v275, 5
      %vm292 = vcmp.lt.s32.totalorder %v276, 5
      %vm293 = vcmp.lt.s32.totalorder %v277, 5
      %vm294 = vcmp.lt.s32.totalorder %v278, 5
      %v295 = vld [vmem:[%s216] sm:$0xff]
      %v296 = vld [vmem:[%s216 + $0x8] sm:$0xff]
      %v297 = vld [vmem:[%s216 + $0x10] sm:$0xff]
      %v298 = vld [vmem:[%s216 + $0x18] sm:$0xff]
      %v299 = vld [vmem:[%s216 + $0x20] sm:$0xff]
      %v300 = vld [vmem:[%s216 + $0x28] sm:$0xff]
      %v301 = vld [vmem:[%s216 + $0x30] sm:$0xff]
      %v302 = vld [vmem:[%s216 + $0x38] sm:$0xff]
      %v303 = vld [vmem:[%s216 + $0x40] sm:$0xff]
      %v304 = vld [vmem:[%s216 + $0x48] sm:$0xff]
      %v305 = vld [vmem:[%s216 + $0x50] sm:$0xff]
      %v306 = vld [vmem:[%s216 + $0x58] sm:$0xff]
      %v307 = vld [vmem:[%s216 + $0x60] sm:$0xff]
      %v308 = vld [vmem:[%s216 + $0x68] sm:$0xff]
      %v309 = vld [vmem:[%s216 + $0x70] sm:$0xff]
      %v310 = vld [vmem:[%s216 + $0x78] sm:$0xff]
      %v311 = vsel %vm279, 1, 0
      %v312 = vsel %vm280, 1, 0
      %v313 = vsel %vm281, 1, 0
      %v314 = vsel %vm282, 1, 0
      %v315 = vsel %vm283, 1, 0
      %v316 = vsel %vm284, 1, 0
      %v317 = vsel %vm285, 1, 0
      %v318 = vsel %vm286, 1, 0
      %v319 = vsel %vm287, 1, 0
      %v320 = vsel %vm288, 1, 0
      %v321 = vsel %vm289, 1, 0
      %v322 = vsel %vm290, 1, 0
      %v323 = vsel %vm291, 1, 0
      %v324 = vsel %vm292, 1, 0
      %v325 = vsel %vm293, 1, 0
      %v326 = vsel %vm294, 1, 0
      %vm327 = vcmp.eq.s32.totalorder %v311, 1
      %vm328 = vcmp.eq.s32.totalorder %v312, 1
      %vm329 = vcmp.eq.s32.totalorder %v313, 1
      %vm330 = vcmp.eq.s32.totalorder %v314, 1
      %vm331 = vcmp.eq.s32.totalorder %v315, 1
      %vm332 = vcmp.eq.s32.totalorder %v316, 1
      %vm333 = vcmp.eq.s32.totalorder %v317, 1
      %vm334 = vcmp.eq.s32.totalorder %v318, 1
      %vm335 = vcmp.eq.s32.totalorder %v319, 1
      %vm336 = vcmp.eq.s32.totalorder %v320, 1
      %vm337 = vcmp.eq.s32.totalorder %v321, 1
      %vm338 = vcmp.eq.s32.totalorder %v322, 1
      %vm339 = vcmp.eq.s32.totalorder %v323, 1
      %vm340 = vcmp.eq.s32.totalorder %v324, 1
      %vm341 = vcmp.eq.s32.totalorder %v325, 1
      %vm342 = vcmp.eq.s32.totalorder %v326, 1
      %v343 = vsel %vm327, %v295, 0.0
      %v344 = vsel %vm328, %v296, 0.0
      %v345 = vsel %vm329, %v297, 0.0
      %v346 = vsel %vm330, %v298, 0.0
      %v347 = vsel %vm331, %v299, 0.0
      %v348 = vsel %vm332, %v300, 0.0
      %v349 = vsel %vm333, %v301, 0.0
      %v350 = vsel %vm334, %v302, 0.0
      %v351 = vsel %vm335, %v303, 0.0
      %v352 = vsel %vm336, %v304, 0.0
      %v353 = vsel %vm337, %v305, 0.0
      %v354 = vsel %vm338, %v306, 0.0
      %v355 = vsel %vm339, %v307, 0.0
      %v356 = vsel %vm340, %v308, 0.0
      %v357 = vsel %vm341, %v309, 0.0
      %v358 = vsel %vm342, %v310, 0.0
      %v359 = vld [vmem:[#allocation2] sm:$0xff]
      %360 = vmatpush.msra.mxu0 %v358
      %361 = vmatpush.msra.mxu0 %v357
      %362 = vmatpush.msra.mxu0 %v356
      %363 = vmatpush.msra.mxu0 %v355
      %364 = vmatpush.msra.mxu0 %v354
      %365 = vmatpush.msra.mxu0 %v353
      %366 = vmatpush.msra.mxu0 %v352
      %367 = vmatpush.msra.mxu0 %v351
      %368 = vmatpush.msra.mxu0 %v350
      %369 = vmatpush.msra.mxu0 %v349
      %370 = vmatpush.msra.mxu0 %v348
      %371 = vmatpush.msra.mxu0 %v347
      %372 = vmatpush.msra.mxu0 %v346
      %373 = vmatpush.msra.mxu0 %v345
      %374 = vmatpush.msra.mxu0 %v344
      %375 = vmatpush.msra.mxu0 %v343
      %376 = vmatmul.f32.gmra.mxu0 %v247
      %v377 = vpop.f32.mrf.mxu0
      %v378 = vadd.f32 0.0, %v377
      %379 = vdwg.mxu0
      %v380 = vadd.f32 %v359, %v378
      %vm381 = vcmask 64512
      %382 = vst.msk [vmem:[#allocation2] sm:$0xff] %vm381, %v380
      // Predicated region
      $region37: #{tpu_custom_call.1} parent=31 // pred_check
        %p383 = pneg %p224
      $region38: #{tpu_custom_call.1} parent=31 // pred_check_branch
        %385 = sbr.rel (%p383) target = $region40
      $region39: #{tpu_custom_call.1} parent=31 // pred_region
        %v386 = vld [vmem:[#allocation2] sm:$0xff]
        %387 = vst.msk [vmem:[%s223] sm:$0xff] %vm381, %v386
      $region40: #{tpu_custom_call.1} parent=31 // pred_fallthru
        _
      %p388 = scmp.lt.s32.totalorder %s18, 1
      %s389 = scalar_select %p388, %s18, 1
      %s390 = smul.addr %s389, 8
      %s391 = scalar_lea.vmem %s3, %s390
      // Predicated region
      $region41: #{tpu_custom_call.1} parent=31 // pred_check
        %p392 = pneg %p122
      $region42: #{tpu_custom_call.1} parent=31 // pred_check_branch
        %394 = sbr.rel (%p392) target = $region44
      $region43: #{tpu_custom_call.1} parent=31 // pred_region
        _
      $region44: #{tpu_custom_call.1} parent=31 // pred_fallthru
        _
    $region32: #{tpu_custom_call.1} parent=5 // pred_fallthru
      _
    %p395 = scmp.le.s32.totalorder 2, %s9
    // Predicated region
    $region45: #{tpu_custom_call.1} parent=5 // pred_check
      %p396 = pneg %p395
    $region46: #{tpu_custom_call.1} parent=5 // pred_check_branch
      %398 = sbr.rel (%p396) target = $region48
    $region47: #{tpu_custom_call.1} parent=5 // pred_region
      %s399 = ssub.s32 %s9, 2
      // Predicated region
      $region49: #{tpu_custom_call.1} parent=47 // pred_check
        %p400 = pneg %p128
      $region50: #{tpu_custom_call.1} parent=47 // pred_check_branch
        %402 = sbr.rel (%p400) target = $region52
      $region51: #{tpu_custom_call.1} parent=47 // pred_region
        %p403 = scmp.lt.s32.totalorder %s20, 1
        %s404 = scalar_select %p403, %s20, 1
        %s405 = smul.addr %s404, 8
        %s406 = scalar_lea.vmem %s3, %s405
      $region52: #{tpu_custom_call.1} parent=47 // pred_fallthru
        _
    $region48: #{tpu_custom_call.1} parent=5 // pred_fallthru
      _
  $region6: #{tpu_custom_call.1} parent=0 // loop_footer
    %s13 = sadd.s32 1, %s9
  $region7: #{tpu_custom_call.1} parent=0 // loop_footer_branch
    %8 = sbr.rel target = $region3
  $region8: #{tpu_custom_call.1} parent=0 // loop_exit
    _

</llo_original>
